<compile_context>
chip_gen: v6e
topology: v6e:2x2x1
jax: 0.10.0
libtpu: 0.0.40
codegen_flags: <defaults>
</compile_context>

<pallas_src>
import jax
import jax.numpy as jnp
from jax.experimental import pallas as pl
from jax.experimental.pallas import tpu as pltpu


HP = 128  # each GRU gate chunk (r / z / n) padded to one 128-lane group


# ---------------------------------------------------------------------------
# Phase 1: per-token gate table (token-only path; no recurrence dependency).
#   gi_table[v] = tanh(emb[v] @ [Wa | -Wc] + [ba | bc]) @ W_ih + b_ih
# ---------------------------------------------------------------------------
def gi_table_kernel(emb_ref, wac_ref, bac_ref, wih_ref, bih_ref, gi_ref):
    combined = jnp.tanh(
        jnp.dot(emb_ref[...], wac_ref[...], preferred_element_type=jnp.float32)
        + bac_ref[...])
    gi_ref[...] = (
        jnp.dot(combined, wih_ref[...], preferred_element_type=jnp.float32)
        + bih_ref[...])


# ---------------------------------------------------------------------------
# Phase 2: GRU recurrence over time, TB timesteps per grid step.
# Only gh = h @ W_hh (+ elementwise gates) is on the serial chain; the logits
# projection is batched once per TB-block.
# ---------------------------------------------------------------------------
def _make_recurrence_kernel(TB, B):
    def kernel(gi_ref, h0_ref, whh_ref, bhh_ref, wout_ref, bout_ref,
               logits_ref, hout_ref, h_carry, h_blk):
        blk = pl.program_id(0)

        @pl.when(blk == 0)
        def _():
            h_carry[...] = h0_ref[...]

        whh = whh_ref[...]
        bhh = bhh_ref[...]

        def step(i, h):
            gh = jnp.dot(h, whh, preferred_element_type=jnp.float32) + bhh
            gi = gi_ref[i]                                    # (B, 3*HP)
            # r and z with one wide sigmoid over 2*HP lanes; all slices are
            # on 128-lane boundaries thanks to the padded gate layout.
            rz = jax.nn.sigmoid(gi[:, :2 * HP] + gh[:, :2 * HP])
            r = rz[:, :HP]
            z = rz[:, HP:]
            n = jnp.tanh(gi[:, 2 * HP:] + r * gh[:, 2 * HP:])
            h_new = (1.0 - z) * n + z * h
            h_blk[i] = h_new
            return h_new

        h_last = jax.lax.fori_loop(0, TB, step, h_carry[...], unroll=True)
        h_carry[...] = h_last

        # Batched logits for the whole block: (TB*B, HP) @ (HP, V), written
        # back as one lane-dense (TB, B, V) slab.
        h_flat = h_blk[...].reshape(TB * B, HP)
        logits = (jnp.dot(h_flat, wout_ref[...],
                          preferred_element_type=jnp.float32) + bout_ref[...])
        logits_ref[...] = logits.reshape(logits_ref.shape).astype(logits_ref.dtype)

        @pl.when(blk == pl.num_programs(0) - 1)
        def _():
            hout_ref[...] = h_last.astype(hout_ref.dtype)

    return kernel


# ---------------------------------------------------------------------------
# Parameter preparation: fuse attic/cellar gates, pad GRU gate chunks to
# 128-lane groups, pad the hidden dim of W_out.  One-time, outside the kernels.
# ---------------------------------------------------------------------------
def _prepare_kernel_params(params, H):
    def pad_gate_cols(w):
        chunks = jnp.split(w, 3, axis=-1)
        pad = [(0, 0)] * (w.ndim - 1) + [(0, HP - H)]
        return jnp.concatenate([jnp.pad(c, pad) for c in chunks], axis=-1)

    return dict(
        wac=jnp.concatenate([params["wa"], -params["wc"]], axis=-1),       # (D, 2H)
        bac=jnp.concatenate([params["ba"], params["bc"]], axis=-1),        # (1, 2H)
        wih=pad_gate_cols(params["wih"]),                                  # (2H, 3*HP)
        bih=pad_gate_cols(params["bih"]),                                  # (1, 3*HP)
        whh=jnp.pad(pad_gate_cols(params["whh"]), ((0, HP - H), (0, 0))),  # (HP, 3*HP)
        bhh=pad_gate_cols(params["bhh"]),                                  # (1, 3*HP)
        wout=jnp.pad(params["wout"], ((0, HP - H), (0, 0))),               # (HP, V)
        bout=params["bout"],                                               # (1, V)
    )


def imagination_space_forward(tokens, params, hidden=None, timesteps_per_block=8):
    """tokens: (B, T) int32. Returns (logits (B, T, V), final hidden (B, H))."""
    emb_table = params["embedding"]                        # (vocab, D)
    B, T = tokens.shape
    vocab, _ = emb_table.shape
    H = params["whh"].shape[0]
    V = params["wout"].shape[-1]

    if hidden is None:
        hidden = jnp.zeros((B, H), jnp.float32)

    kp = _prepare_kernel_params(params, H)

    # ---- Phase 1: token-only gate table, (vocab, 3*HP) f32.
    gi_table = pl.pallas_call(
        gi_table_kernel,
        out_shape=jax.ShapeDtypeStruct((vocab, 3 * HP), jnp.float32),
    )(emb_table, kp["wac"], kp["bac"], kp["wih"], kp["bih"])

    # Gather per-(t, b) gate rows time-major; subsumes the embedding lookup.
    gi_seq = jnp.take(gi_table, tokens.T, axis=0)          # (T, B, 3*HP)

    # Hidden state padded to a full 128-lane vreg (pad lanes provably stay 0).
    h0 = jnp.pad(hidden.astype(jnp.float32), ((0, 0), (0, HP - H)))

    # ---- Phase 2: serial recurrence, TB timesteps per grid step.
    tb = min(timesteps_per_block, T)
    while T % tb:
        tb -= 1
    grid = (T // tb,)

    const = lambda shape: pl.BlockSpec(shape, lambda b: (0,) * len(shape))

    grid_spec = pltpu.PrefetchScalarGridSpec(
        num_scalar_prefetch=0,
        grid=grid,
        in_specs=[
            pl.BlockSpec((tb, B, 3 * HP), lambda b: (b, 0, 0)),  # gi time-block
            const((B, HP)),                                      # h0 (resident)
            const((HP, 3 * HP)), const((1, 3 * HP)),             # W_hh, b_hh
            const((HP, V)), const((1, V)),                       # W_out, b_out
        ],
        out_specs=[
            pl.BlockSpec((tb, B, V), lambda b: (b, 0, 0)),       # logits block
            const((B, HP)),                                      # final hidden
        ],
        scratch_shapes=[
            pltpu.VMEM((B, HP), jnp.float32),       # hidden carried across blocks
            pltpu.VMEM((tb, B, HP), jnp.float32),   # per-block hidden stage
        ],
    )

    logits_tbv, h_final = pl.pallas_call(
        _make_recurrence_kernel(tb, B),
        out_shape=(
            jax.ShapeDtypeStruct((T, B, V), jnp.float32),
            jax.ShapeDtypeStruct((B, HP), jnp.float32),
        ),
        grid_spec=grid_spec,
        compiler_params=pltpu.CompilerParams(
            dimension_semantics=("arbitrary",)),     # recurrence: must stay serial
    )(gi_seq, h0, kp["whh"], kp["bhh"], kp["wout"], kp["bout"])

    return jnp.transpose(logits_tbv, (1, 0, 2)), h_final[:, :H]


# ---------------------------------------------------------------------------
# Parameters + pure-JAX reference (mirrors the PyTorch module, unfused).
# ---------------------------------------------------------------------------
def init_params(key, vocab_size, dim, hidden_dim):
    ks = jax.random.split(key, 12)
    u = lambda k, shape, s: jax.random.uniform(
        k, shape, jnp.float32, minval=-s, maxval=s)
    d_scale = 1.0 / jnp.sqrt(dim)
    h_scale = 1.0 / jnp.sqrt(hidden_dim)

    return {
        "embedding": jax.random.normal(ks[0], (vocab_size, dim), jnp.float32),
        # nn.Linear(dim, hidden_dim) weights stored transposed (dim, hidden_dim)
        "wa": u(ks[1], (dim, hidden_dim), d_scale),
        "ba": u(ks[2], (1, hidden_dim), d_scale),
        "wc": u(ks[3], (dim, hidden_dim), d_scale),
        "bc": u(ks[4], (1, hidden_dim), d_scale),
        # nn.GRUCell(2H, H): W_ih^T (2H, 3H), W_hh^T (H, 3H), chunks [r, z, n]
        "wih": u(ks[5], (2 * hidden_dim, 3 * hidden_dim), h_scale),
        "bih": u(ks[6], (1, 3 * hidden_dim), h_scale),
        "whh": u(ks[7], (hidden_dim, 3 * hidden_dim), h_scale),
        "bhh": u(ks[8], (1, 3 * hidden_dim), h_scale),
        # nn.Linear(hidden_dim, vocab_size) transposed
        "wout": u(ks[9], (hidden_dim, vocab_size), h_scale),
        "bout": u(ks[10], (1, vocab_size), h_scale),
    }


def reference_forward(tokens, params, hidden=None):
    emb_table = params["embedding"]
    B, T = tokens.shape
    H = params["whh"].shape[0]
    if hidden is None:
        hidden = jnp.zeros((B, H), jnp.float32)
    logits_out = []
    for t in range(T):
        emb = emb_table[tokens[:, t]]
        attic = jnp.tanh(emb @ params["wa"] + params["ba"])
        cellar = jnp.tanh((-emb) @ params["wc"] + params["bc"])
        combined = jnp.concatenate([attic, cellar], axis=-1)
        gi = combined @ params["wih"] + params["bih"]
        gh = hidden @ params["whh"] + params["bhh"]
        r = jax.nn.sigmoid(gi[:, :H] + gh[:, :H])
        z = jax.nn.sigmoid(gi[:, H:2 * H] + gh[:, H:2 * H])
        n = jnp.tanh(gi[:, 2 * H:] + r * gh[:, 2 * H:])
        hidden = (1.0 - z) * n + z * hidden
        logits_out.append(hidden @ params["wout"] + params["bout"])
    return jnp.stack(logits_out, axis=1), hidden


if __name__ == "__main__":
    # TODO(synk): the PyTorch `generate()` method (host-driven autoregressive
    # multinomial sampling) is not implemented as a kernel.
    batch, seq_len = 8, 8
    vocab_size, dim, hidden_dim = 256, 16, 32   # V=256 keeps the output lane-dense

    key = jax.random.PRNGKey(0)
    k_tok, k_p = jax.random.split(key, 2)
    tokens = jax.random.randint(k_tok, (batch, seq_len), 0, vocab_size, jnp.int32)
    params = init_params(k_p, vocab_size, dim, hidden_dim)

    logits, h_final = imagination_space_forward(tokens, params)
    logits = jax.block_until_ready(logits)
    h_final = jax.block_until_ready(h_final)

    ref_logits, ref_h = reference_forward(tokens, params)

    assert logits.shape == (batch, seq_len, vocab_size)
    assert h_final.shape == (batch, hidden_dim)
    assert jnp.allclose(logits, ref_logits, atol=1e-4, rtol=1e-4), \
        "logits mismatch vs JAX reference"
    assert jnp.allclose(h_final, ref_h, atol=1e-4, rtol=1e-4), \
        "hidden mismatch vs JAX reference"

    print("KERNEL_OK")
</pallas_src>

<mosaic_0001>
module attributes {stable_mosaic.version = 11 : i64} {
  func.func @gi_table_kernel(%arg0: memref<256x16xf32, #tpu.memory_space<vmem>>, %arg1: memref<16x64xf32, #tpu.memory_space<vmem>>, %arg2: memref<1x64xf32, #tpu.memory_space<vmem>>, %arg3: memref<64x384xf32, #tpu.memory_space<vmem>>, %arg4: memref<1x384xf32, #tpu.memory_space<vmem>>, %arg5: memref<256x384xf32, #tpu.memory_space<vmem>>) attributes {dimension_semantics = [], scalar_prefetch = 0 : i64, scratch_operands = 0 : i64, tpu.core_type = #tpu.core_type<tc>} {
    %c0 = arith.constant 0 : index
    %c0_0 = arith.constant 0 : index
    %0 = vector.load %arg0[%c0, %c0_0] : memref<256x16xf32, #tpu.memory_space<vmem>>, vector<256x16xf32>
    %c0_1 = arith.constant 0 : index
    %c0_2 = arith.constant 0 : index
    %1 = vector.load %arg1[%c0_1, %c0_2] : memref<16x64xf32, #tpu.memory_space<vmem>>, vector<16x64xf32>
    %cst = arith.constant dense<0.000000e+00> : vector<256x64xf32>
    %2 = tpu.matmul %0, %1, %cst {dimension_numbers = #tpu.dot_dimension_numbers<[1], [0], [0], [1], [0, 0, 1, 1], [], []>} : vector<256x16xf32>, vector<16x64xf32>, vector<256x64xf32> -> vector<256x64xf32>
    %c0_3 = arith.constant 0 : index
    %c0_4 = arith.constant 0 : index
    %3 = vector.load %arg2[%c0_3, %c0_4] : memref<1x64xf32, #tpu.memory_space<vmem>>, vector<1x64xf32>
    %4 = vector.broadcast %3 : vector<1x64xf32> to vector<256x64xf32>
    %5 = arith.addf %2, %4 : vector<256x64xf32>
    %6 = math.tanh %5 : vector<256x64xf32>
    %c0_5 = arith.constant 0 : index
    %c0_6 = arith.constant 0 : index
    %7 = vector.load %arg3[%c0_5, %c0_6] : memref<64x384xf32, #tpu.memory_space<vmem>>, vector<64x384xf32>
    %cst_7 = arith.constant dense<0.000000e+00> : vector<256x384xf32>
    %8 = tpu.matmul %6, %7, %cst_7 {dimension_numbers = #tpu.dot_dimension_numbers<[1], [0], [0], [1], [0, 0, 1, 1], [], []>} : vector<256x64xf32>, vector<64x384xf32>, vector<256x384xf32> -> vector<256x384xf32>
    %c0_8 = arith.constant 0 : index
    %c0_9 = arith.constant 0 : index
    %9 = vector.load %arg4[%c0_8, %c0_9] : memref<1x384xf32, #tpu.memory_space<vmem>>, vector<1x384xf32>
    %10 = vector.broadcast %9 : vector<1x384xf32> to vector<256x384xf32>
    %11 = arith.addf %8, %10 : vector<256x384xf32>
    %c0_10 = arith.constant 0 : index
    %c0_11 = arith.constant 0 : index
    %12 = vector.load %arg5[%c0_10, %c0_11] : memref<256x384xf32, #tpu.memory_space<vmem>>, vector<256x384xf32>
    tpu.vector_store %arg5[%c0_10, %c0_11], %11 {strides = array<i32>} : memref<256x384xf32, #tpu.memory_space<vmem>>, vector<256x384xf32>,
    return
  }
}

</mosaic_0001>

<llo_original>
// kernel: tpu_custom_call.1
$region0: #{tpu_custom_call.1}
  #allocation0 [shape = 'u32[]', space=smem, size = 0x4, offset = 0x4, fixed_abs, tag = 'smem constant byte address 0x4 - core index']
  #allocation1 [shape = 'u32[144,128]{1,0:T(1,128)}', space=vmem, size = 0x12000, scoped, tag = 'internal scratch']
  %s0 = inlined_call_operand.vmem [shape: f32[256,16], index: 0, kind: input, shape index: {}]
  %s1 = inlined_call_operand.vmem [shape: f32[16,64], index: 1, kind: input, shape index: {}]
  %s2 = inlined_call_operand.vmem [shape: f32[1,64], index: 2, kind: input, shape index: {}]
  %s3 = inlined_call_operand.vmem [shape: f32[64,384], index: 3, kind: input, shape index: {}]
  %s4 = inlined_call_operand.vmem [shape: f32[1,384], index: 4, kind: input, shape index: {}]
  %s5 = inlined_call_operand.hbm [shape: f32[256,384], index: 5, kind: output, shape index: {}]
  %s6 = sld [smem:[#allocation0]]
  $region30: #{tpu_custom_call.1} parent=0
    _
  %s8 = ssub.s32 1, %s6
  %s9 = scalar_select 0, %s8, %s6
  $region1: #{tpu_custom_call.1} parent=0
    #allocation2 [shape = 'u8[393216]{0}', space=vmem, size = 0x60000, scoped, tag = 'output window, operand 0, single buffered']
    #allocation3 [shape = 's32[1]{0}', space=sflag, size = 0x4, scoped, tag = 'scoped memory for tpu_custom_call.1']
    %10 = vsyncpa [#allocation3], 0
    // Predicated region
    $region2: #{tpu_custom_call.1} parent=1 // pred_check
      _
    $region3: #{tpu_custom_call.1} parent=1 // pred_check_branch
      %12 = sbr.rel (0) target = $region5
    $region4: #{tpu_custom_call.1} parent=1 // pred_region
      _
    $region5: #{tpu_custom_call.1} parent=1 // pred_fallthru
      _
    // Predicated region
    $region6: #{tpu_custom_call.1} parent=1 // pred_check
      _
    $region7: #{tpu_custom_call.1} parent=1 // pred_check_branch
      %14 = sbr.rel (0) target = $region9
    $region8: #{tpu_custom_call.1} parent=1 // pred_region
      _
    $region9: #{tpu_custom_call.1} parent=1 // pred_fallthru
      _
    // Predicated region
    $region10: #{tpu_custom_call.1} parent=1 // pred_check
      _
    $region11: #{tpu_custom_call.1} parent=1 // pred_check_branch
      %16 = sbr.rel (0) target = $region13
    $region12: #{tpu_custom_call.1} parent=1 // pred_region
      _
    $region13: #{tpu_custom_call.1} parent=1 // pred_fallthru
      _
    // Predicated region
    $region14: #{tpu_custom_call.1} parent=1 // pred_check
      _
    $region15: #{tpu_custom_call.1} parent=1 // pred_check_branch
      %18 = sbr.rel (0) target = $region17
    $region16: #{tpu_custom_call.1} parent=1 // pred_region
      _
    $region17: #{tpu_custom_call.1} parent=1 // pred_fallthru
      _
    // Predicated region
    $region18: #{tpu_custom_call.1} parent=1 // pred_check
      _
    $region19: #{tpu_custom_call.1} parent=1 // pred_check_branch
      %20 = sbr.rel (0) target = $region21
    $region20: #{tpu_custom_call.1} parent=1 // pred_region
      _
    $region21: #{tpu_custom_call.1} parent=1 // pred_fallthru
      _
    %v21 = vld [vmem:[%s0] sm:$0xff]
    %v22 = vld [vmem:[%s0 + $0x8] sm:$0xff]
    %v23 = vld [vmem:[%s0 + $0x10] sm:$0xff]
    %v24 = vld [vmem:[%s0 + $0x18] sm:$0xff]
    %v25 = vld [vmem:[%s0 + $0x20] sm:$0xff]
    %v26 = vld [vmem:[%s0 + $0x28] sm:$0xff]
    %v27 = vld [vmem:[%s0 + $0x30] sm:$0xff]
    %v28 = vld [vmem:[%s0 + $0x38] sm:$0xff]
    %v29 = vld [vmem:[%s0 + $0x40] sm:$0xff]
    %v30 = vld [vmem:[%s0 + $0x48] sm:$0xff]
    %v31 = vld [vmem:[%s0 + $0x50] sm:$0xff]
    %v32 = vld [vmem:[%s0 + $0x58] sm:$0xff]
    %v33 = vld [vmem:[%s0 + $0x60] sm:$0xff]
    %v34 = vld [vmem:[%s0 + $0x68] sm:$0xff]
    %v35 = vld [vmem:[%s0 + $0x70] sm:$0xff]
    %v36 = vld [vmem:[%s0 + $0x78] sm:$0xff]
    %v37 = vld [vmem:[%s0 + $0x80] sm:$0xff]
    %v38 = vld [vmem:[%s0 + $0x88] sm:$0xff]
    %v39 = vld [vmem:[%s0 + $0x90] sm:$0xff]
    %v40 = vld [vmem:[%s0 + $0x98] sm:$0xff]
    %v41 = vld [vmem:[%s0 + $0xa0] sm:$0xff]
    %v42 = vld [vmem:[%s0 + $0xa8] sm:$0xff]
    %v43 = vld [vmem:[%s0 + $0xb0] sm:$0xff]
    %v44 = vld [vmem:[%s0 + $0xb8] sm:$0xff]
    %v45 = vld [vmem:[%s0 + $0xc0] sm:$0xff]
    %v46 = vld [vmem:[%s0 + $0xc8] sm:$0xff]
    %v47 = vld [vmem:[%s0 + $0xd0] sm:$0xff]
    %v48 = vld [vmem:[%s0 + $0xd8] sm:$0xff]
    %v49 = vld [vmem:[%s0 + $0xe0] sm:$0xff]
    %v50 = vld [vmem:[%s0 + $0xe8] sm:$0xff]
    %v51 = vld [vmem:[%s0 + $0xf0] sm:$0xff]
    %v52 = vld [vmem:[%s0 + $0xf8] sm:$0xff]
    %v53 = vld [vmem:[%s1] sm:$0xff]
    %v54 = vld [vmem:[%s1 + $0x8] sm:$0xff]
    %v55 = vld [vmem:[%s2] sm:$0x1]
    %v57 = vlaneseq
    %v58 = vshrl.u32 %v57, 7
    %v59 = vsub.s32 0, %v58
    %v60 = vrot.slane %v55, %v59
    %vm62 = vcmask 130048
    %v64 = vsel %vm62, %v21, 0
    %v67 = vsel %vm62, %v22, 0
    %v70 = vsel %vm62, %v23, 0
    %v73 = vsel %vm62, %v24, 0
    %v76 = vsel %vm62, %v25, 0
    %v79 = vsel %vm62, %v26, 0
    %v82 = vsel %vm62, %v27, 0
    %v85 = vsel %vm62, %v28, 0
    %v88 = vsel %vm62, %v29, 0
    %v91 = vsel %vm62, %v30, 0
    %v94 = vsel %vm62, %v31, 0
    %v97 = vsel %vm62, %v32, 0
    %v100 = vsel %vm62, %v33, 0
    %v103 = vsel %vm62, %v34, 0
    %v106 = vsel %vm62, %v35, 0
    %v109 = vsel %vm62, %v36, 0
    %v112 = vsel %vm62, %v37, 0
    %v115 = vsel %vm62, %v38, 0
    %v118 = vsel %vm62, %v39, 0
    %v121 = vsel %vm62, %v40, 0
    %v124 = vsel %vm62, %v41, 0
    %v127 = vsel %vm62, %v42, 0
    %v130 = vsel %vm62, %v43, 0
    %v133 = vsel %vm62, %v44, 0
    %v136 = vsel %vm62, %v45, 0
    %v139 = vsel %vm62, %v46, 0
    %v142 = vsel %vm62, %v47, 0
    %v145 = vsel %vm62, %v48, 0
    %v148 = vsel %vm62, %v49, 0
    %v151 = vsel %vm62, %v50, 0
    %v154 = vsel %vm62, %v51, 0
    %v157 = vsel %vm62, %v52, 0
    %159 = vmatprep.subr.mxu0 0.0
    %160 = vmatpush1.msra.mxu0 0.0
    %161 = vmatprep.subr.mxu0 0.0
    %162 = vmatpush1.msra.mxu0 0.0
    %163 = vmatprep.subr.mxu0 0.0
    %164 = vmatpush1.msra.mxu0 0.0
    %165 = vmatprep.subr.mxu0 0.0
    %166 = vmatpush1.msra.mxu0 0.0
    %167 = vmatprep.subr.mxu0 0.0
    %168 = vmatpush1.msra.mxu0 0.0
    %169 = vmatprep.subr.mxu0 0.0
    %170 = vmatpush1.msra.mxu0 0.0
    %171 = vmatprep.subr.mxu0 0.0
    %172 = vmatpush1.msra.mxu0 0.0
    %173 = vmatprep.subr.mxu0 0.0
    %174 = vmatpush1.msra.mxu0 0.0
    %175 = vmatprep.subr.mxu0 0.0
    %176 = vmatpush1.msra.mxu0 0.0
    %177 = vmatprep.subr.mxu0 0.0
    %178 = vmatpush1.msra.mxu0 0.0
    %179 = vmatprep.subr.mxu0 0.0
    %180 = vmatpush1.msra.mxu0 0.0
    %181 = vmatprep.subr.mxu0 0.0
    %182 = vmatpush1.msra.mxu0 0.0
    %183 = vmatprep.subr.mxu0 0.0
    %184 = vmatpush1.msra.mxu0 0.0
    %185 = vmatprep.subr.mxu0 0.0
    %186 = vmatpush1.msra.mxu0 0.0
    %187 = vmatprep.subr.mxu0 0.0
    %188 = vmatpush1.msra.mxu0 %v54
    %189 = vmatprep.subr.mxu0 0.0
    %190 = vmatpush1.msra.mxu0 %v53
    %191 = vmatprep.subr.mxu0 0.0
    %192 = vmatpush2.msra.mxu0 0.0
    %193 = vmatprep.subr.mxu0 0.0
    %194 = vmatpush2.msra.mxu0 0.0
    %195 = vmatprep.subr.mxu0 0.0
    %196 = vmatpush2.msra.mxu0 0.0
    %197 = vmatprep.subr.mxu0 0.0
    %198 = vmatpush2.msra.mxu0 0.0
    %199 = vmatprep.subr.mxu0 0.0
    %200 = vmatpush2.msra.mxu0 0.0
    %201 = vmatprep.subr.mxu0 0.0
    %202 = vmatpush2.msra.mxu0 0.0
    %203 = vmatprep.subr.mxu0 0.0
    %204 = vmatpush2.msra.mxu0 0.0
    %205 = vmatprep.subr.mxu0 0.0
    %206 = vmatpush2.msra.mxu0 0.0
    %207 = vmatprep.subr.mxu0 0.0
    %208 = vmatpush2.msra.mxu0 0.0
    %209 = vmatprep.subr.mxu0 0.0
    %210 = vmatpush2.msra.mxu0 0.0
    %211 = vmatprep.subr.mxu0 0.0
    %212 = vmatpush2.msra.mxu0 0.0
    %213 = vmatprep.subr.mxu0 0.0
    %214 = vmatpush2.msra.mxu0 0.0
    %215 = vmatprep.subr.mxu0 0.0
    %216 = vmatpush2.msra.mxu0 0.0
    %217 = vmatprep.subr.mxu0 0.0
    %218 = vmatpush2.msra.mxu0 0.0
    %219 = vmatprep.subr.mxu0 0.0
    %220 = vmatpush2.msra.mxu0 0.0
    %221 = vmatprep.subr.mxu0 0.0
    %222 = vmatpush2.msra.mxu0 0.0
    %223 = vmatprep.mubr.f32.mxu0 0.0
    %224 = vmatmul.mubr.f32.gmra.mxu0 %v64
    %v225 = vpop.f32.mrf.mxu0
    %v226 = vadd.f32 %v60, %v225
    %v227 = vpop.f32.mrf.mxu0
    %228 = vmatprep.mubr.f32.mxu0 0.0
    %229 = vmatmul.mubr.f32.gmra.mxu0 %v67
    %v230 = vpop.f32.mrf.mxu0
    %v231 = vadd.f32 %v60, %v230
    %v232 = vpop.f32.mrf.mxu0
    %233 = vmatprep.mubr.f32.mxu0 0.0
    %234 = vmatmul.mubr.f32.gmra.mxu0 %v70
    %v235 = vpop.f32.mrf.mxu0
    %v236 = vadd.f32 %v60, %v235
    %v237 = vpop.f32.mrf.mxu0
    %238 = vmatprep.mubr.f32.mxu0 0.0
    %239 = vmatmul.mubr.f32.gmra.mxu0 %v73
    %v240 = vpop.f32.mrf.mxu0
    %v241 = vadd.f32 %v60, %v240
    %v242 = vpop.f32.mrf.mxu0
    %243 = vmatprep.mubr.f32.mxu0 0.0
    %244 = vmatmul.mubr.f32.gmra.mxu0 %v76
    %v245 = vpop.f32.mrf.mxu0
    %v246 = vadd.f32 %v60, %v245
    %v247 = vpop.f32.mrf.mxu0
    %248 = vmatprep.mubr.f32.mxu0 0.0
    %249 = vmatmul.mubr.f32.gmra.mxu0 %v79
    %v250 = vpop.f32.mrf.mxu0
    %v251 = vadd.f32 %v60, %v250
    %v252 = vpop.f32.mrf.mxu0
    %253 = vmatprep.mubr.f32.mxu0 0.0
    %254 = vmatmul.mubr.f32.gmra.mxu0 %v82
    %v255 = vpop.f32.mrf.mxu0
    %v256 = vadd.f32 %v60, %v255
    %v257 = vpop.f32.mrf.mxu0
    %258 = vmatprep.mubr.f32.mxu0 0.0
    %259 = vmatmul.mubr.f32.gmra.mxu0 %v85
    %v260 = vpop.f32.mrf.mxu0
    %v261 = vadd.f32 %v60, %v260
    %v262 = vpop.f32.mrf.mxu0
    %263 = vmatprep.mubr.f32.mxu0 0.0
    %264 = vmatmul.mubr.f32.gmra.mxu0 %v88
    %v265 = vpop.f32.mrf.mxu0
    %v266 = vadd.f32 %v60, %v265
    %v267 = vpop.f32.mrf.mxu0
    %268 = vmatprep.mubr.f32.mxu0 0.0
    %269 = vmatmul.mubr.f32.gmra.mxu0 %v91
    %v270 = vpop.f32.mrf.mxu0
    %v271 = vadd.f32 %v60, %v270
    %v272 = vpop.f32.mrf.mxu0
    %273 = vmatprep.mubr.f32.mxu0 0.0
    %274 = vmatmul.mubr.f32.gmra.mxu0 %v94
    %v275 = vpop.f32.mrf.mxu0
    %v276 = vadd.f32 %v60, %v275
    %v277 = vpop.f32.mrf.mxu0
    %278 = vmatprep.mubr.f32.mxu0 0.0
    %279 = vmatmul.mubr.f32.gmra.mxu0 %v97
    %v280 = vpop.f32.mrf.mxu0
    %v281 = vadd.f32 %v60, %v280
    %v282 = vpop.f32.mrf.mxu0
    %283 = vmatprep.mubr.f32.mxu0 0.0
    %284 = vmatmul.mubr.f32.gmra.mxu0 %v100
    %v285 = vpop.f32.mrf.mxu0
    %v286 = vadd.f32 %v60, %v285
    %v287 = vpop.f32.mrf.mxu0
    %288 = vmatprep.mubr.f32.mxu0 0.0
    %289 = vmatmul.mubr.f32.gmra.mxu0 %v103
    %v290 = vpop.f32.mrf.mxu0
    %v291 = vadd.f32 %v60, %v290
    %v292 = vpop.f32.mrf.mxu0
    %293 = vmatprep.mubr.f32.mxu0 0.0
    %294 = vmatmul.mubr.f32.gmra.mxu0 %v106
    %v295 = vpop.f32.mrf.mxu0
    %v296 = vadd.f32 %v60, %v295
    %v297 = vpop.f32.mrf.mxu0
    %298 = vmatprep.mubr.f32.mxu0 0.0
    %299 = vmatmul.mubr.f32.gmra.mxu0 %v109
    %v300 = vpop.f32.mrf.mxu0
    %v301 = vadd.f32 %v60, %v300
    %v302 = vpop.f32.mrf.mxu0
    %303 = vmatprep.mubr.f32.mxu0 0.0
    %304 = vmatmul.mubr.f32.gmra.mxu0 %v112
    %v305 = vpop.f32.mrf.mxu0
    %v306 = vadd.f32 %v60, %v305
    %v307 = vpop.f32.mrf.mxu0
    %308 = vmatprep.mubr.f32.mxu0 0.0
    %309 = vmatmul.mubr.f32.gmra.mxu0 %v115
    %v310 = vpop.f32.mrf.mxu0
    %v311 = vadd.f32 %v60, %v310
    %v312 = vpop.f32.mrf.mxu0
    %313 = vmatprep.mubr.f32.mxu0 0.0
    %314 = vmatmul.mubr.f32.gmra.mxu0 %v118
    %v315 = vpop.f32.mrf.mxu0
    %v316 = vadd.f32 %v60, %v315
    %v317 = vpop.f32.mrf.mxu0
    %318 = vmatprep.mubr.f32.mxu0 0.0
    %319 = vmatmul.mubr.f32.gmra.mxu0 %v121
    %v320 = vpop.f32.mrf.mxu0
    %v321 = vadd.f32 %v60, %v320
    %v322 = vpop.f32.mrf.mxu0
    %323 = vmatprep.mubr.f32.mxu0 0.0
    %324 = vmatmul.mubr.f32.gmra.mxu0 %v124
    %v325 = vpop.f32.mrf.mxu0
    %v326 = vadd.f32 %v60, %v325
    %v327 = vpop.f32.mrf.mxu0
    %328 = vmatprep.mubr.f32.mxu0 0.0
    %329 = vmatmul.mubr.f32.gmra.mxu0 %v127
    %v330 = vpop.f32.mrf.mxu0
    %v331 = vadd.f32 %v60, %v330
    %v332 = vpop.f32.mrf.mxu0
    %333 = vmatprep.mubr.f32.mxu0 0.0
    %334 = vmatmul.mubr.f32.gmra.mxu0 %v130
    %v335 = vpop.f32.mrf.mxu0
    %v336 = vadd.f32 %v60, %v335
    %v337 = vpop.f32.mrf.mxu0
    %338 = vmatprep.mubr.f32.mxu0 0.0
    %339 = vmatmul.mubr.f32.gmra.mxu0 %v133
    %v340 = vpop.f32.mrf.mxu0
    %v341 = vadd.f32 %v60, %v340
    %v342 = vpop.f32.mrf.mxu0
    %343 = vmatprep.mubr.f32.mxu0 0.0
    %344 = vmatmul.mubr.f32.gmra.mxu0 %v136
    %v345 = vpop.f32.mrf.mxu0
    %v346 = vadd.f32 %v60, %v345
    %v347 = vpop.f32.mrf.mxu0
    %348 = vmatprep.mubr.f32.mxu0 0.0
    %349 = vmatmul.mubr.f32.gmra.mxu0 %v139
    %v350 = vpop.f32.mrf.mxu0
    %v351 = vadd.f32 %v60, %v350
    %v352 = vpop.f32.mrf.mxu0
    %353 = vmatprep.mubr.f32.mxu0 0.0
    %354 = vmatmul.mubr.f32.gmra.mxu0 %v142
    %v355 = vpop.f32.mrf.mxu0
    %v356 = vadd.f32 %v60, %v355
    %v357 = vpop.f32.mrf.mxu0
    %358 = vmatprep.mubr.f32.mxu0 0.0
    %359 = vmatmul.mubr.f32.gmra.mxu0 %v145
    %v360 = vpop.f32.mrf.mxu0
    %v361 = vadd.f32 %v60, %v360
    %v362 = vpop.f32.mrf.mxu0
    %363 = vmatprep.mubr.f32.mxu0 0.0
    %364 = vmatmul.mubr.f32.gmra.mxu0 %v148
    %v365 = vpop.f32.mrf.mxu0
    %v366 = vadd.f32 %v60, %v365
    %v367 = vpop.f32.mrf.mxu0
    %368 = vmatprep.mubr.f32.mxu0 0.0
    %369 = vmatmul.mubr.f32.gmra.mxu0 %v151
    %v370 = vpop.f32.mrf.mxu0
    %v371 = vadd.f32 %v60, %v370
    %v372 = vpop.f32.mrf.mxu0
    %373 = vmatprep.mubr.f32.mxu0 0.0
    %374 = vmatmul.mubr.f32.gmra.mxu0 %v154
    %v375 = vpop.f32.mrf.mxu0
    %v376 = vadd.f32 %v60, %v375
    %v377 = vpop.f32.mrf.mxu0
    %378 = vmatprep.mubr.f32.mxu0 0.0
    %379 = vmatmul.mubr.f32.gmra.mxu0 %v157
    %v380 = vpop.f32.mrf.mxu0
    %v381 = vadd.f32 %v60, %v380
    %v382 = vpop.f32.mrf.mxu0
    %383 = vdwg.mxu0
    %v384 = vtanh.pop %v226
    %v385 = vtanh.pop %v231
    %v386 = vtanh.pop %v236
    %v387 = vtanh.pop %v241
    %v388 = vtanh.pop %v246
    %v389 = vtanh.pop %v251
    %v390 = vtanh.pop %v256
    %v391 = vtanh.pop %v261
    %v392 = vtanh.pop %v266
    %v393 = vtanh.pop %v271
    %v394 = vtanh.pop %v276
    %v395 = vtanh.pop %v281
    %v396 = vtanh.pop %v286
    %v397 = vtanh.pop %v291
    %v398 = vtanh.pop %v296
    %v399 = vtanh.pop %v301
    %v400 = vtanh.pop %v306
    %v401 = vtanh.pop %v311
    %v402 = vtanh.pop %v316
    %v403 = vtanh.pop %v321
    %v404 = vtanh.pop %v326
    %v405 = vtanh.pop %v331
    %v406 = vtanh.pop %v336
    %v407 = vtanh.pop %v341
    %v408 = vtanh.pop %v346
    %v409 = vtanh.pop %v351
    %v410 = vtanh.pop %v356
    %v411 = vtanh.pop %v361
    %v412 = vtanh.pop %v366
    %v413 = vtanh.pop %v371
    %v414 = vtanh.pop %v376
    %v415 = vtanh.pop %v381
    %v416 = vld [vmem:[%s3] sm:$0xff]
    %v417 = vld [vmem:[%s3 + $0x8] sm:$0xff]
    %v418 = vld [vmem:[%s3 + $0x10] sm:$0xff]
    %v419 = vld [vmem:[%s3 + $0x18] sm:$0xff]
    %v420 = vld [vmem:[%s3 + $0x20] sm:$0xff]
    %v421 = vld [vmem:[%s3 + $0x28] sm:$0xff]
    %v422 = vld [vmem:[%s3 + $0x30] sm:$0xff]
    %v423 = vld [vmem:[%s3 + $0x38] sm:$0xff]
    %v424 = vld [vmem:[%s3 + $0x40] sm:$0xff]
    %v425 = vld [vmem:[%s3 + $0x48] sm:$0xff]
    %v426 = vld [vmem:[%s3 + $0x50] sm:$0xff]
    %v427 = vld [vmem:[%s3 + $0x58] sm:$0xff]
    %v428 = vld [vmem:[%s3 + $0x60] sm:$0xff]
    %v429 = vld [vmem:[%s3 + $0x68] sm:$0xff]
    %v430 = vld [vmem:[%s3 + $0x70] sm:$0xff]
    %v431 = vld [vmem:[%s3 + $0x78] sm:$0xff]
    %v432 = vld [vmem:[%s3 + $0x80] sm:$0xff]
    %v433 = vld [vmem:[%s3 + $0x88] sm:$0xff]
    %v434 = vld [vmem:[%s3 + $0x90] sm:$0xff]
    %v435 = vld [vmem:[%s3 + $0x98] sm:$0xff]
    %v436 = vld [vmem:[%s3 + $0xa0] sm:$0xff]
    %v437 = vld [vmem:[%s3 + $0xa8] sm:$0xff]
    %v438 = vld [vmem:[%s3 + $0xb0] sm:$0xff]
    %v439 = vld [vmem:[%s3 + $0xb8] sm:$0xff]
    %v440 = vld [vmem:[%s4] sm:$0x7]
    %v442 = vlaneseq
    %v443 = vshrl.u32 %v442, 7
    %v444 = vsub.s32 0, %v443
    %v445 = vrot.slane %v440, %v444
    %v446 = vlaneseq
    %v447 = vshrl.u32 %v446, 7
    %v448 = vsub.s32 1, %v447
    %v449 = vrot.slane %v440, %v448
    %v450 = vlaneseq
    %v451 = vshrl.u32 %v450, 7
    %v452 = vsub.s32 2, %v451
    %v453 = vrot.slane %v440, %v452
    %vm457 = vcmask 523264
    %v459 = vsel %vm457, %v384, 0
    %v462 = vsel %vm457, %v385, 0
    %v465 = vsel %vm457, %v386, 0
    %v468 = vsel %vm457, %v387, 0
    %v471 = vsel %vm457, %v388, 0
    %v474 = vsel %vm457, %v389, 0
    %v477 = vsel %vm457, %v390, 0
    %v480 = vsel %vm457, %v391, 0
    %v483 = vsel %vm457, %v392, 0
    %v486 = vsel %vm457, %v393, 0
    %v489 = vsel %vm457, %v394, 0
    %v492 = vsel %vm457, %v395, 0
    %v495 = vsel %vm457, %v396, 0
    %v498 = vsel %vm457, %v397, 0
    %v501 = vsel %vm457, %v398, 0
    %v504 = vsel %vm457, %v399, 0
    %v507 = vsel %vm457, %v400, 0
    %v510 = vsel %vm457, %v401, 0
    %v513 = vsel %vm457, %v402, 0
    %v516 = vsel %vm457, %v403, 0
    %v519 = vsel %vm457, %v404, 0
    %v522 = vsel %vm457, %v405, 0
    %v525 = vsel %vm457, %v406, 0
    %v528 = vsel %vm457, %v407, 0
    %v531 = vsel %vm457, %v408, 0
    %v534 = vsel %vm457, %v409, 0
    %v537 = vsel %vm457, %v410, 0
    %v540 = vsel %vm457, %v411, 0
    %v543 = vsel %vm457, %v412, 0
    %v546 = vsel %vm457, %v413, 0
    %v549 = vsel %vm457, %v414, 0
    %v552 = vsel %vm457, %v415, 0
    %554 = vmatprep.subr.mxu0 0.0
    %555 = vmatpush1.msra.mxu0 0.0
    %556 = vmatprep.subr.mxu0 0.0
    %557 = vmatpush1.msra.mxu0 0.0
    %558 = vmatprep.subr.mxu0 0.0
    %559 = vmatpush1.msra.mxu0 0.0
    %560 = vmatprep.subr.mxu0 0.0
    %561 = vmatpush1.msra.mxu0 0.0
    %562 = vmatprep.subr.mxu0 0.0
    %563 = vmatpush1.msra.mxu0 0.0
    %564 = vmatprep.subr.mxu0 0.0
    %565 = vmatpush1.msra.mxu0 0.0
    %566 = vmatprep.subr.mxu0 0.0
    %567 = vmatpush1.msra.mxu0 0.0
    %568 = vmatprep.subr.mxu0 0.0
    %569 = vmatpush1.msra.mxu0 0.0
    %570 = vmatprep.subr.mxu0 %v438
    %571 = vmatpush1.msra.mxu0 %v437
    %572 = vmatprep.subr.mxu0 %v435
    %573 = vmatpush1.msra.mxu0 %v434
    %574 = vmatprep.subr.mxu0 %v432
    %575 = vmatpush1.msra.mxu0 %v431
    %576 = vmatprep.subr.mxu0 %v429
    %577 = vmatpush1.msra.mxu0 %v428
    %578 = vmatprep.subr.mxu0 %v426
    %579 = vmatpush1.msra.mxu0 %v425
    %580 = vmatprep.subr.mxu0 %v423
    %581 = vmatpush1.msra.mxu0 %v422
    %582 = vmatprep.subr.mxu0 %v420
    %583 = vmatpush1.msra.mxu0 %v419
    %584 = vmatprep.subr.mxu0 %v417
    %585 = vmatpush1.msra.mxu0 %v416
    %586 = vmatprep.subr.mxu0 0.0
    %587 = vmatpush2.msra.mxu0 0.0
    %588 = vmatprep.subr.mxu0 0.0
    %589 = vmatpush2.msra.mxu0 0.0
    %590 = vmatprep.subr.mxu0 0.0
    %591 = vmatpush2.msra.mxu0 0.0
    %592 = vmatprep.subr.mxu0 0.0
    %593 = vmatpush2.msra.mxu0 0.0
    %594 = vmatprep.subr.mxu0 0.0
    %595 = vmatpush2.msra.mxu0 0.0
    %596 = vmatprep.subr.mxu0 0.0
    %597 = vmatpush2.msra.mxu0 0.0
    %598 = vmatprep.subr.mxu0 0.0
    %599 = vmatpush2.msra.mxu0 0.0
    %600 = vmatprep.subr.mxu0 0.0
    %601 = vmatpush2.msra.mxu0 0.0
    %602 = vmatprep.subr.mxu0 0.0
    %603 = vmatpush2.msra.mxu0 0.0
    %604 = vmatprep.subr.mxu0 0.0
    %605 = vmatpush2.msra.mxu0 0.0
    %606 = vmatprep.subr.mxu0 0.0
    %607 = vmatpush2.msra.mxu0 0.0
    %608 = vmatprep.subr.mxu0 0.0
    %609 = vmatpush2.msra.mxu0 0.0
    %610 = vmatprep.subr.mxu0 0.0
    %611 = vmatpush2.msra.mxu0 0.0
    %612 = vmatprep.subr.mxu0 0.0
    %613 = vmatpush2.msra.mxu0 0.0
    %614 = vmatprep.subr.mxu0 0.0
    %615 = vmatpush2.msra.mxu0 0.0
    %616 = vmatprep.subr.mxu0 0.0
    %617 = vmatpush2.msra.mxu0 0.0
    %618 = vmatprep.mubr.f32.mxu0 0.0
    %619 = vmatmul.mubr.f32.gmra.mxu0 %v459
    %v620 = vpop.f32.mrf.mxu0
    %v621 = vadd.f32 %v445, %v620
    %v622 = vpop.f32.mrf.mxu0
    %v623 = vadd.f32 %v449, %v622
    %624 = vmatprep.mubr.f32.mxu0 0.0
    %625 = vmatmul.mubr.f32.gmra.mxu0 %v462
    %v626 = vpop.f32.mrf.mxu0
    %v627 = vadd.f32 %v445, %v626
    %v628 = vpop.f32.mrf.mxu0
    %v629 = vadd.f32 %v449, %v628
    %630 = vmatprep.mubr.f32.mxu0 0.0
    %631 = vmatmul.mubr.f32.gmra.mxu0 %v465
    %v632 = vpop.f32.mrf.mxu0
    %v633 = vadd.f32 %v445, %v632
    %v634 = vpop.f32.mrf.mxu0
    %v635 = vadd.f32 %v449, %v634
    %636 = vmatprep.mubr.f32.mxu0 0.0
    %637 = vmatmul.mubr.f32.gmra.mxu0 %v468
    %v638 = vpop.f32.mrf.mxu0
    %v639 = vadd.f32 %v445, %v638
    %v640 = vpop.f32.mrf.mxu0
    %v641 = vadd.f32 %v449, %v640
    %642 = vmatprep.mubr.f32.mxu0 0.0
    %643 = vmatmul.mubr.f32.gmra.mxu0 %v471
    %v644 = vpop.f32.mrf.mxu0
    %v645 = vadd.f32 %v445, %v644
    %v646 = vpop.f32.mrf.mxu0
    %v647 = vadd.f32 %v449, %v646
    %648 = vmatprep.mubr.f32.mxu0 0.0
    %649 = vmatmul.mubr.f32.gmra.mxu0 %v474
    %v650 = vpop.f32.mrf.mxu0
    %v651 = vadd.f32 %v445, %v650
    %v652 = vpop.f32.mrf.mxu0
    %v653 = vadd.f32 %v449, %v652
    %654 = vmatprep.mubr.f32.mxu0 0.0
    %655 = vmatmul.mubr.f32.gmra.mxu0 %v477
    %v656 = vpop.f32.mrf.mxu0
    %v657 = vadd.f32 %v445, %v656
    %v658 = vpop.f32.mrf.mxu0
    %v659 = vadd.f32 %v449, %v658
    %660 = vmatprep.mubr.f32.mxu0 0.0
    %661 = vmatmul.mubr.f32.gmra.mxu0 %v480
    %v662 = vpop.f32.mrf.mxu0
    %v663 = vadd.f32 %v445, %v662
    %v664 = vpop.f32.mrf.mxu0
    %v665 = vadd.f32 %v449, %v664
    %666 = vmatprep.mubr.f32.mxu0 0.0
    %667 = vmatmul.mubr.f32.gmra.mxu0 %v483
    %v668 = vpop.f32.mrf.mxu0
    %v669 = vadd.f32 %v445, %v668
    %v670 = vpop.f32.mrf.mxu0
    %v671 = vadd.f32 %v449, %v670
    %672 = vmatprep.mubr.f32.mxu0 0.0
    %673 = vmatmul.mubr.f32.gmra.mxu0 %v486
    %v674 = vpop.f32.mrf.mxu0
    %v675 = vadd.f32 %v445, %v674
    %v676 = vpop.f32.mrf.mxu0
    %v677 = vadd.f32 %v449, %v676
    %678 = vmatprep.mubr.f32.mxu0 0.0
    %679 = vmatmul.mubr.f32.gmra.mxu0 %v489
    %v680 = vpop.f32.mrf.mxu0
    %v681 = vadd.f32 %v445, %v680
    %v682 = vpop.f32.mrf.mxu0
    %v683 = vadd.f32 %v449, %v682
    %684 = vmatprep.mubr.f32.mxu0 0.0
    %685 = vmatmul.mubr.f32.gmra.mxu0 %v492
    %v686 = vpop.f32.mrf.mxu0
    %v687 = vadd.f32 %v445, %v686
    %v688 = vpop.f32.mrf.mxu0
    %v689 = vadd.f32 %v449, %v688
    %690 = vmatprep.mubr.f32.mxu0 0.0
    %691 = vmatmul.mubr.f32.gmra.mxu0 %v495
    %v692 = vpop.f32.mrf.mxu0
    %v693 = vadd.f32 %v445, %v692
    %v694 = vpop.f32.mrf.mxu0
    %v695 = vadd.f32 %v449, %v694
    %696 = vmatprep.mubr.f32.mxu0 0.0
    %697 = vmatmul.mubr.f32.gmra.mxu0 %v498
    %v698 = vpop.f32.mrf.mxu0
    %v699 = vadd.f32 %v445, %v698
    %v700 = vpop.f32.mrf.mxu0
    %v701 = vadd.f32 %v449, %v700
    %702 = vmatprep.mubr.f32.mxu0 0.0
    %703 = vmatmul.mubr.f32.gmra.mxu0 %v501
    %v704 = vpop.f32.mrf.mxu0
    %v705 = vadd.f32 %v445, %v704
    %v706 = vpop.f32.mrf.mxu0
    %v707 = vadd.f32 %v449, %v706
    %708 = vmatprep.mubr.f32.mxu0 0.0
    %709 = vmatmul.mubr.f32.gmra.mxu0 %v504
    %v710 = vpop.f32.mrf.mxu0
    %v711 = vadd.f32 %v445, %v710
    %v712 = vpop.f32.mrf.mxu0
    %v713 = vadd.f32 %v449, %v712
    %714 = vmatprep.mubr.f32.mxu0 0.0
    %715 = vmatmul.mubr.f32.gmra.mxu0 %v507
    %v716 = vpop.f32.mrf.mxu0
    %v717 = vadd.f32 %v445, %v716
    %v718 = vpop.f32.mrf.mxu0
    %v719 = vadd.f32 %v449, %v718
    %720 = vmatprep.mubr.f32.mxu0 0.0
    %721 = vmatmul.mubr.f32.gmra.mxu0 %v510
    %v722 = vpop.f32.mrf.mxu0
    %v723 = vadd.f32 %v445, %v722
    %v724 = vpop.f32.mrf.mxu0
    %v725 = vadd.f32 %v449, %v724
    %726 = vmatprep.mubr.f32.mxu0 0.0
    %727 = vmatmul.mubr.f32.gmra.mxu0 %v513
    %v728 = vpop.f32.mrf.mxu0
    %v729 = vadd.f32 %v445, %v728
    %v730 = vpop.f32.mrf.mxu0
    %v731 = vadd.f32 %v449, %v730
    %732 = vmatprep.mubr.f32.mxu0 0.0
    %733 = vmatmul.mubr.f32.gmra.mxu0 %v516
    %v734 = vpop.f32.mrf.mxu0
    %v735 = vadd.f32 %v445, %v734
    %v736 = vpop.f32.mrf.mxu0
    %v737 = vadd.f32 %v449, %v736
    %738 = vmatprep.mubr.f32.mxu0 0.0
    %739 = vmatmul.mubr.f32.gmra.mxu0 %v519
    %v740 = vpop.f32.mrf.mxu0
    %v741 = vadd.f32 %v445, %v740
    %v742 = vpop.f32.mrf.mxu0
    %v743 = vadd.f32 %v449, %v742
    %744 = vmatprep.mubr.f32.mxu0 0.0
    %745 = vmatmul.mubr.f32.gmra.mxu0 %v522
    %v746 = vpop.f32.mrf.mxu0
    %v747 = vadd.f32 %v445, %v746
    %v748 = vpop.f32.mrf.mxu0
    %v749 = vadd.f32 %v449, %v748
    %750 = vmatprep.mubr.f32.mxu0 0.0
    %751 = vmatmul.mubr.f32.gmra.mxu0 %v525
    %v752 = vpop.f32.mrf.mxu0
    %v753 = vadd.f32 %v445, %v752
    %v754 = vpop.f32.mrf.mxu0
    %v755 = vadd.f32 %v449, %v754
    %756 = vmatprep.mubr.f32.mxu0 0.0
    %757 = vmatmul.mubr.f32.gmra.mxu0 %v528
    %v758 = vpop.f32.mrf.mxu0
    %v759 = vadd.f32 %v445, %v758
    %v760 = vpop.f32.mrf.mxu0
    %v761 = vadd.f32 %v449, %v760
    %762 = vmatprep.mubr.f32.mxu0 0.0
    %763 = vmatmul.mubr.f32.gmra.mxu0 %v531
    %v764 = vpop.f32.mrf.mxu0
    %v765 = vadd.f32 %v445, %v764
    %v766 = vpop.f32.mrf.mxu0
    %v767 = vadd.f32 %v449, %v766
    %768 = vmatprep.mubr.f32.mxu0 0.0
    %769 = vmatmul.mubr.f32.gmra.mxu0 %v534
    %v770 = vpop.f32.mrf.mxu0
    %v771 = vadd.f32 %v445, %v770
    %v772 = vpop.f32.mrf.mxu0
    %v773 = vadd.f32 %v449, %v772
    %774 = vmatprep.mubr.f32.mxu0 0.0
    %775 = vmatmul.mubr.f32.gmra.mxu0 %v537
    %v776 = vpop.f32.mrf.mxu0
    %v777 = vadd.f32 %v445, %v776
    %v778 = vpop.f32.mrf.mxu0
    %v779 = vadd.f32 %v449, %v778
    %780 = vmatprep.mubr.f32.mxu0 0.0
    %781 = vmatmul.mubr.f32.gmra.mxu0 %v540
    %v782 = vpop.f32.mrf.mxu0
    %v783 = vadd.f32 %v445, %v782
    %v784 = vpop.f32.mrf.mxu0
    %v785 = vadd.f32 %v449, %v784
    %786 = vmatprep.mubr.f32.mxu0 0.0
    %787 = vmatmul.mubr.f32.gmra.mxu0 %v543
    %v788 = vpop.f32.mrf.mxu0
    %v789 = vadd.f32 %v445, %v788
    %v790 = vpop.f32.mrf.mxu0
    %v791 = vadd.f32 %v449, %v790
    %792 = vmatprep.mubr.f32.mxu0 0.0
    %793 = vmatmul.mubr.f32.gmra.mxu0 %v546
    %v794 = vpop.f32.mrf.mxu0
    %v795 = vadd.f32 %v445, %v794
    %v796 = vpop.f32.mrf.mxu0
    %v797 = vadd.f32 %v449, %v796
    %798 = vmatprep.mubr.f32.mxu0 0.0
    %799 = vmatmul.mubr.f32.gmra.mxu0 %v549
    %v800 = vpop.f32.mrf.mxu0
    %v801 = vadd.f32 %v445, %v800
    %v802 = vpop.f32.mrf.mxu0
    %v803 = vadd.f32 %v449, %v802
    %804 = vmatprep.mubr.f32.mxu0 0.0
    %805 = vmatmul.mubr.f32.gmra.mxu0 %v552
    %v806 = vpop.f32.mrf.mxu0
    %v807 = vadd.f32 %v445, %v806
    %v808 = vpop.f32.mrf.mxu0
    %v809 = vadd.f32 %v449, %v808
    %810 = vdwg.mxu0
    %811 = vmatprep.subr.mxu0 0.0
    %812 = vmatpush1.msra.mxu0 0.0
    %813 = vmatprep.subr.mxu0 0.0
    %814 = vmatpush1.msra.mxu0 0.0
    %815 = vmatprep.subr.mxu0 0.0
    %816 = vmatpush1.msra.mxu0 0.0
    %817 = vmatprep.subr.mxu0 0.0
    %818 = vmatpush1.msra.mxu0 0.0
    %819 = vmatprep.subr.mxu0 0.0
    %820 = vmatpush1.msra.mxu0 0.0
    %821 = vmatprep.subr.mxu0 0.0
    %822 = vmatpush1.msra.mxu0 0.0
    %823 = vmatprep.subr.mxu0 0.0
    %824 = vmatpush1.msra.mxu0 0.0
    %825 = vmatprep.subr.mxu0 0.0
    %826 = vmatpush1.msra.mxu0 0.0
    %827 = vmatprep.subr.mxu0 0.0
    %828 = vmatpush1.msra.mxu0 %v439
    %829 = vmatprep.subr.mxu0 0.0
    %830 = vmatpush1.msra.mxu0 %v436
    %831 = vmatprep.subr.mxu0 0.0
    %832 = vmatpush1.msra.mxu0 %v433
    %833 = vmatprep.subr.mxu0 0.0
    %834 = vmatpush1.msra.mxu0 %v430
    %835 = vmatprep.subr.mxu0 0.0
    %836 = vmatpush1.msra.mxu0 %v427
    %837 = vmatprep.subr.mxu0 0.0
    %838 = vmatpush1.msra.mxu0 %v424
    %839 = vmatprep.subr.mxu0 0.0
    %840 = vmatpush1.msra.mxu0 %v421
    %841 = vmatprep.subr.mxu0 0.0
    %842 = vmatpush1.msra.mxu0 %v418
    %843 = vmatprep.subr.mxu0 0.0
    %844 = vmatpush2.msra.mxu0 0.0
    %845 = vmatprep.subr.mxu0 0.0
    %846 = vmatpush2.msra.mxu0 0.0
    %847 = vmatprep.subr.mxu0 0.0
    %848 = vmatpush2.msra.mxu0 0.0
    %849 = vmatprep.subr.mxu0 0.0
    %850 = vmatpush2.msra.mxu0 0.0
    %851 = vmatprep.subr.mxu0 0.0
    %852 = vmatpush2.msra.mxu0 0.0
    %853 = vmatprep.subr.mxu0 0.0
    %854 = vmatpush2.msra.mxu0 0.0
    %855 = vmatprep.subr.mxu0 0.0
    %856 = vmatpush2.msra.mxu0 0.0
    %857 = vmatprep.subr.mxu0 0.0
    %858 = vmatpush2.msra.mxu0 0.0
    %859 = vmatprep.subr.mxu0 0.0
    %860 = vmatpush2.msra.mxu0 0.0
    %861 = vmatprep.subr.mxu0 0.0
    %862 = vmatpush2.msra.mxu0 0.0
    %863 = vmatprep.subr.mxu0 0.0
    %864 = vmatpush2.msra.mxu0 0.0
    %865 = vmatprep.subr.mxu0 0.0
    %866 = vmatpush2.msra.mxu0 0.0
    %867 = vmatprep.subr.mxu0 0.0
    %868 = vmatpush2.msra.mxu0 0.0
    %869 = vmatprep.subr.mxu0 0.0
    %870 = vmatpush2.msra.mxu0 0.0
    %871 = vmatprep.subr.mxu0 0.0
    %872 = vmatpush2.msra.mxu0 0.0
    %873 = vmatprep.subr.mxu0 0.0
    %874 = vmatpush2.msra.mxu0 0.0
    %875 = vmatprep.mubr.f32.mxu0 0.0
    %876 = vmatmul.mubr.f32.gmra.mxu0 %v459
    %v877 = vpop.f32.mrf.mxu0
    %v878 = vadd.f32 %v453, %v877
    %v879 = vpop.f32.mrf.mxu0
    %880 = vmatprep.mubr.f32.mxu0 0.0
    %881 = vmatmul.mubr.f32.gmra.mxu0 %v462
    %v882 = vpop.f32.mrf.mxu0
    %v883 = vadd.f32 %v453, %v882
    %v884 = vpop.f32.mrf.mxu0
    %885 = vmatprep.mubr.f32.mxu0 0.0
    %886 = vmatmul.mubr.f32.gmra.mxu0 %v465
    %v887 = vpop.f32.mrf.mxu0
    %v888 = vadd.f32 %v453, %v887
    %v889 = vpop.f32.mrf.mxu0
    %890 = vmatprep.mubr.f32.mxu0 0.0
    %891 = vmatmul.mubr.f32.gmra.mxu0 %v468
    %v892 = vpop.f32.mrf.mxu0
    %v893 = vadd.f32 %v453, %v892
    %v894 = vpop.f32.mrf.mxu0
    %895 = vmatprep.mubr.f32.mxu0 0.0
    %896 = vmatmul.mubr.f32.gmra.mxu0 %v471
    %v897 = vpop.f32.mrf.mxu0
    %v898 = vadd.f32 %v453, %v897
    %v899 = vpop.f32.mrf.mxu0
    %900 = vmatprep.mubr.f32.mxu0 0.0
    %901 = vmatmul.mubr.f32.gmra.mxu0 %v474
    %v902 = vpop.f32.mrf.mxu0
    %v903 = vadd.f32 %v453, %v902
    %v904 = vpop.f32.mrf.mxu0
    %905 = vmatprep.mubr.f32.mxu0 0.0
    %906 = vmatmul.mubr.f32.gmra.mxu0 %v477
    %v907 = vpop.f32.mrf.mxu0
    %v908 = vadd.f32 %v453, %v907
    %v909 = vpop.f32.mrf.mxu0
    %910 = vmatprep.mubr.f32.mxu0 0.0
    %911 = vmatmul.mubr.f32.gmra.mxu0 %v480
    %v912 = vpop.f32.mrf.mxu0
    %v913 = vadd.f32 %v453, %v912
    %v914 = vpop.f32.mrf.mxu0
    %915 = vmatprep.mubr.f32.mxu0 0.0
    %916 = vmatmul.mubr.f32.gmra.mxu0 %v483
    %v917 = vpop.f32.mrf.mxu0
    %v918 = vadd.f32 %v453, %v917
    %v919 = vpop.f32.mrf.mxu0
    %920 = vmatprep.mubr.f32.mxu0 0.0
    %921 = vmatmul.mubr.f32.gmra.mxu0 %v486
    %v922 = vpop.f32.mrf.mxu0
    %v923 = vadd.f32 %v453, %v922
    %v924 = vpop.f32.mrf.mxu0
    %925 = vmatprep.mubr.f32.mxu0 0.0
    %926 = vmatmul.mubr.f32.gmra.mxu0 %v489
    %v927 = vpop.f32.mrf.mxu0
    %v928 = vadd.f32 %v453, %v927
    %v929 = vpop.f32.mrf.mxu0
    %930 = vmatprep.mubr.f32.mxu0 0.0
    %931 = vmatmul.mubr.f32.gmra.mxu0 %v492
    %v932 = vpop.f32.mrf.mxu0
    %v933 = vadd.f32 %v453, %v932
    %v934 = vpop.f32.mrf.mxu0
    %935 = vmatprep.mubr.f32.mxu0 0.0
    %936 = vmatmul.mubr.f32.gmra.mxu0 %v495
    %v937 = vpop.f32.mrf.mxu0
    %v938 = vadd.f32 %v453, %v937
    %v939 = vpop.f32.mrf.mxu0
    %940 = vmatprep.mubr.f32.mxu0 0.0
    %941 = vmatmul.mubr.f32.gmra.mxu0 %v498
    %v942 = vpop.f32.mrf.mxu0
    %v943 = vadd.f32 %v453, %v942
    %v944 = vpop.f32.mrf.mxu0
    %945 = vmatprep.mubr.f32.mxu0 0.0
    %946 = vmatmul.mubr.f32.gmra.mxu0 %v501
    %v947 = vpop.f32.mrf.mxu0
    %v948 = vadd.f32 %v453, %v947
    %v949 = vpop.f32.mrf.mxu0
    %950 = vmatprep.mubr.f32.mxu0 0.0
    %951 = vmatmul.mubr.f32.gmra.mxu0 %v504
    %v952 = vpop.f32.mrf.mxu0
    %v953 = vadd.f32 %v453, %v952
    %v954 = vpop.f32.mrf.mxu0
    %955 = vmatprep.mubr.f32.mxu0 0.0
    %956 = vmatmul.mubr.f32.gmra.mxu0 %v507
    %v957 = vpop.f32.mrf.mxu0
    %v958 = vadd.f32 %v453, %v957
    %v959 = vpop.f32.mrf.mxu0
    %960 = vmatprep.mubr.f32.mxu0 0.0
    %961 = vmatmul.mubr.f32.gmra.mxu0 %v510
    %v962 = vpop.f32.mrf.mxu0
    %v963 = vadd.f32 %v453, %v962
    %v964 = vpop.f32.mrf.mxu0
    %965 = vmatprep.mubr.f32.mxu0 0.0
    %966 = vmatmul.mubr.f32.gmra.mxu0 %v513
    %v967 = vpop.f32.mrf.mxu0
    %v968 = vadd.f32 %v453, %v967
    %v969 = vpop.f32.mrf.mxu0
    %970 = vmatprep.mubr.f32.mxu0 0.0
    %971 = vmatmul.mubr.f32.gmra.mxu0 %v516
    %v972 = vpop.f32.mrf.mxu0
    %v973 = vadd.f32 %v453, %v972
    %v974 = vpop.f32.mrf.mxu0
    %975 = vmatprep.mubr.f32.mxu0 0.0
    %976 = vmatmul.mubr.f32.gmra.mxu0 %v519
    %v977 = vpop.f32.mrf.mxu0
    %v978 = vadd.f32 %v453, %v977
    %v979 = vpop.f32.mrf.mxu0
    %980 = vmatprep.mubr.f32.mxu0 0.0
    %981 = vmatmul.mubr.f32.gmra.mxu0 %v522
    %v982 = vpop.f32.mrf.mxu0
    %v983 = vadd.f32 %v453, %v982
    %v984 = vpop.f32.mrf.mxu0
    %985 = vmatprep.mubr.f32.mxu0 0.0
    %986 = vmatmul.mubr.f32.gmra.mxu0 %v525
    %v987 = vpop.f32.mrf.mxu0
    %v988 = vadd.f32 %v453, %v987
    %v989 = vpop.f32.mrf.mxu0
    %990 = vmatprep.mubr.f32.mxu0 0.0
    %991 = vmatmul.mubr.f32.gmra.mxu0 %v528
    %v992 = vpop.f32.mrf.mxu0
    %v993 = vadd.f32 %v453, %v992
    %v994 = vpop.f32.mrf.mxu0
    %995 = vmatprep.mubr.f32.mxu0 0.0
    %996 = vmatmul.mubr.f32.gmra.mxu0 %v531
    %v997 = vpop.f32.mrf.mxu0
    %v998 = vadd.f32 %v453, %v997
    %v999 = vpop.f32.mrf.mxu0
    %1000 = vmatprep.mubr.f32.mxu0 0.0
    %1001 = vmatmul.mubr.f32.gmra.mxu0 %v534
    %v1002 = vpop.f32.mrf.mxu0
    %v1003 = vadd.f32 %v453, %v1002
    %v1004 = vpop.f32.mrf.mxu0
    %1005 = vmatprep.mubr.f32.mxu0 0.0
    %1006 = vmatmul.mubr.f32.gmra.mxu0 %v537
    %v1007 = vpop.f32.mrf.mxu0
    %v1008 = vadd.f32 %v453, %v1007
    %v1009 = vpop.f32.mrf.mxu0
    %1010 = vmatprep.mubr.f32.mxu0 0.0
    %1011 = vmatmul.mubr.f32.gmra.mxu0 %v540
    %v1012 = vpop.f32.mrf.mxu0
    %v1013 = vadd.f32 %v453, %v1012
    %v1014 = vpop.f32.mrf.mxu0
    %1015 = vmatprep.mubr.f32.mxu0 0.0
    %1016 = vmatmul.mubr.f32.gmra.mxu0 %v543
    %v1017 = vpop.f32.mrf.mxu0
    %v1018 = vadd.f32 %v453, %v1017
    %v1019 = vpop.f32.mrf.mxu0
    %1020 = vmatprep.mubr.f32.mxu0 0.0
    %1021 = vmatmul.mubr.f32.gmra.mxu0 %v546
    %v1022 = vpop.f32.mrf.mxu0
    %v1023 = vadd.f32 %v453, %v1022
    %v1024 = vpop.f32.mrf.mxu0
    %1025 = vmatprep.mubr.f32.mxu0 0.0
    %1026 = vmatmul.mubr.f32.gmra.mxu0 %v549
    %v1027 = vpop.f32.mrf.mxu0
    %v1028 = vadd.f32 %v453, %v1027
    %v1029 = vpop.f32.mrf.mxu0
    %1030 = vmatprep.mubr.f32.mxu0 0.0
    %1031 = vmatmul.mubr.f32.gmra.mxu0 %v552
    %v1032 = vpop.f32.mrf.mxu0
    %v1033 = vadd.f32 %v453, %v1032
    %v1034 = vpop.f32.mrf.mxu0
    %1035 = vdwg.mxu0
    %1036 = vst [vmem:[#allocation2] sm:$0xff] %v621
    %1037 = vst [vmem:[#allocation2 + $0x8] sm:$0xff] %v623
    %1038 = vst [vmem:[#allocation2 + $0x10] sm:$0xff] %v878
    %1039 = vst [vmem:[#allocation2 + $0x18] sm:$0xff] %v627
    %1040 = vst [vmem:[#allocation2 + $0x20] sm:$0xff] %v629
    %1041 = vst [vmem:[#allocation2 + $0x28] sm:$0xff] %v883
    %1042 = vst [vmem:[#allocation2 + $0x30] sm:$0xff] %v633
    %1043 = vst [vmem:[#allocation2 + $0x38] sm:$0xff] %v635
    %1044 = vst [vmem:[#allocation2 + $0x40] sm:$0xff] %v888
    %1045 = vst [vmem:[#allocation2 + $0x48] sm:$0xff] %v639
    %1046 = vst [vmem:[#allocation2 + $0x50] sm:$0xff] %v641
    %1047 = vst [vmem:[#allocation2 + $0x58] sm:$0xff] %v893
    %1048 = vst [vmem:[#allocation2 + $0x60] sm:$0xff] %v645
    %1049 = vst [vmem:[#allocation2 + $0x68] sm:$0xff] %v647
    %1050 = vst [vmem:[#allocation2 + $0x70] sm:$0xff] %v898
    %1051 = vst [vmem:[#allocation2 + $0x78] sm:$0xff] %v651
    %1052 = vst [vmem:[#allocation2 + $0x80] sm:$0xff] %v653
    %1053 = vst [vmem:[#allocation2 + $0x88] sm:$0xff] %v903
    %1054 = vst [vmem:[#allocation2 + $0x90] sm:$0xff] %v657
    %1055 = vst [vmem:[#allocation2 + $0x98] sm:$0xff] %v659
    %1056 = vst [vmem:[#allocation2 + $0xa0] sm:$0xff] %v908
    %1057 = vst [vmem:[#allocation2 + $0xa8] sm:$0xff] %v663
    %1058 = vst [vmem:[#allocation2 + $0xb0] sm:$0xff] %v665
    %1059 = vst [vmem:[#allocation2 + $0xb8] sm:$0xff] %v913
    %1060 = vst [vmem:[#allocation2 + $0xc0] sm:$0xff] %v669
    %1061 = vst [vmem:[#allocation2 + $0xc8] sm:$0xff] %v671
    %1062 = vst [vmem:[#allocation2 + $0xd0] sm:$0xff] %v918
    %1063 = vst [vmem:[#allocation2 + $0xd8] sm:$0xff] %v675
    %1064 = vst [vmem:[#allocation2 + $0xe0] sm:$0xff] %v677
    %1065 = vst [vmem:[#allocation2 + $0xe8] sm:$0xff] %v923
    %1066 = vst [vmem:[#allocation2 + $0xf0] sm:$0xff] %v681
    %1067 = vst [vmem:[#allocation2 + $0xf8] sm:$0xff] %v683
    %1068 = vst [vmem:[#allocation2 + $0x100] sm:$0xff] %v928
    %1069 = vst [vmem:[#allocation2 + $0x108] sm:$0xff] %v687
    %1070 = vst [vmem:[#allocation2 + $0x110] sm:$0xff] %v689
    %1071 = vst [vmem:[#allocation2 + $0x118] sm:$0xff] %v933
    %1072 = vst [vmem:[#allocation2 + $0x120] sm:$0xff] %v693
    %1073 = vst [vmem:[#allocation2 + $0x128] sm:$0xff] %v695
    %1074 = vst [vmem:[#allocation2 + $0x130] sm:$0xff] %v938
    %1075 = vst [vmem:[#allocation2 + $0x138] sm:$0xff] %v699
    %1076 = vst [vmem:[#allocation2 + $0x140] sm:$0xff] %v701
    %1077 = vst [vmem:[#allocation2 + $0x148] sm:$0xff] %v943
    %1078 = vst [vmem:[#allocation2 + $0x150] sm:$0xff] %v705
    %1079 = vst [vmem:[#allocation2 + $0x158] sm:$0xff] %v707
    %1080 = vst [vmem:[#allocation2 + $0x160] sm:$0xff] %v948
    %1081 = vst [vmem:[#allocation2 + $0x168] sm:$0xff] %v711
    %1082 = vst [vmem:[#allocation2 + $0x170] sm:$0xff] %v713
    %1083 = vst [vmem:[#allocation2 + $0x178] sm:$0xff] %v953
    %1084 = vst [vmem:[#allocation2 + $0x180] sm:$0xff] %v717
    %1085 = vst [vmem:[#allocation2 + $0x188] sm:$0xff] %v719
    %1086 = vst [vmem:[#allocation2 + $0x190] sm:$0xff] %v958
    %1087 = vst [vmem:[#allocation2 + $0x198] sm:$0xff] %v723
    %1088 = vst [vmem:[#allocation2 + $0x1a0] sm:$0xff] %v725
    %1089 = vst [vmem:[#allocation2 + $0x1a8] sm:$0xff] %v963
    %1090 = vst [vmem:[#allocation2 + $0x1b0] sm:$0xff] %v729
    %1091 = vst [vmem:[#allocation2 + $0x1b8] sm:$0xff] %v731
    %1092 = vst [vmem:[#allocation2 + $0x1c0] sm:$0xff] %v968
    %1093 = vst [vmem:[#allocation2 + $0x1c8] sm:$0xff] %v735
    %1094 = vst [vmem:[#allocation2 + $0x1d0] sm:$0xff] %v737
    %1095 = vst [vmem:[#allocation2 + $0x1d8] sm:$0xff] %v973
    %1096 = vst [vmem:[#allocation2 + $0x1e0] sm:$0xff] %v741
    %1097 = vst [vmem:[#allocation2 + $0x1e8] sm:$0xff] %v743
    %1098 = vst [vmem:[#allocation2 + $0x1f0] sm:$0xff] %v978
    %1099 = vst [vmem:[#allocation2 + $0x1f8] sm:$0xff] %v747
    %1100 = vst [vmem:[#allocation2 + $0x200] sm:$0xff] %v749
    %1101 = vst [vmem:[#allocation2 + $0x208] sm:$0xff] %v983
    %1102 = vst [vmem:[#allocation2 + $0x210] sm:$0xff] %v753
    %1103 = vst [vmem:[#allocation2 + $0x218] sm:$0xff] %v755
    %1104 = vst [vmem:[#allocation2 + $0x220] sm:$0xff] %v988
    %1105 = vst [vmem:[#allocation2 + $0x228] sm:$0xff] %v759
    %1106 = vst [vmem:[#allocation2 + $0x230] sm:$0xff] %v761
    %1107 = vst [vmem:[#allocation2 + $0x238] sm:$0xff] %v993
    %1108 = vst [vmem:[#allocation2 + $0x240] sm:$0xff] %v765
    %1109 = vst [vmem:[#allocation2 + $0x248] sm:$0xff] %v767
    %1110 = vst [vmem:[#allocation2 + $0x250] sm:$0xff] %v998
    %1111 = vst [vmem:[#allocation2 + $0x258] sm:$0xff] %v771
    %1112 = vst [vmem:[#allocation2 + $0x260] sm:$0xff] %v773
    %1113 = vst [vmem:[#allocation2 + $0x268] sm:$0xff] %v1003
    %1114 = vst [vmem:[#allocation2 + $0x270] sm:$0xff] %v777
    %1115 = vst [vmem:[#allocation2 + $0x278] sm:$0xff] %v779
    %1116 = vst [vmem:[#allocation2 + $0x280] sm:$0xff] %v1008
    %1117 = vst [vmem:[#allocation2 + $0x288] sm:$0xff] %v783
    %1118 = vst [vmem:[#allocation2 + $0x290] sm:$0xff] %v785
    %1119 = vst [vmem:[#allocation2 + $0x298] sm:$0xff] %v1013
    %1120 = vst [vmem:[#allocation2 + $0x2a0] sm:$0xff] %v789
    %1121 = vst [vmem:[#allocation2 + $0x2a8] sm:$0xff] %v791
    %1122 = vst [vmem:[#allocation2 + $0x2b0] sm:$0xff] %v1018
    %1123 = vst [vmem:[#allocation2 + $0x2b8] sm:$0xff] %v795
    %1124 = vst [vmem:[#allocation2 + $0x2c0] sm:$0xff] %v797
    %1125 = vst [vmem:[#allocation2 + $0x2c8] sm:$0xff] %v1023
    %1126 = vst [vmem:[#allocation2 + $0x2d0] sm:$0xff] %v801
    %1127 = vst [vmem:[#allocation2 + $0x2d8] sm:$0xff] %v803
    %1128 = vst [vmem:[#allocation2 + $0x2e0] sm:$0xff] %v1028
    %1129 = vst [vmem:[#allocation2 + $0x2e8] sm:$0xff] %v807
    %1130 = vst [vmem:[#allocation2 + $0x2f0] sm:$0xff] %v809
    %1131 = vst [vmem:[#allocation2 + $0x2f8] sm:$0xff] %v1033
    // Predicated region
    $region22: #{tpu_custom_call.1} parent=1 // pred_check
      _
    $region23: #{tpu_custom_call.1} parent=1 // pred_check_branch
      %1133 = sbr.rel (0) target = $region25
    $region24: #{tpu_custom_call.1} parent=1 // pred_region
      %s1135 = ssub.s32 12288, 12288
      %1136 = vsyncadd [#allocation3], %s1135
      %s1137 = sshll.u32 [#allocation2], 4
      %s1138 = int_to_ptr.vmem [resolvable:$true] %s1137
      %1143 = dma.vmem_to_hbm [thread:$0]  %s1138, 12288, %s5, [#allocation3], 384, 384, 24
    $region25: #{tpu_custom_call.1} parent=1 // pred_fallthru
      _
    // Predicated region
    $region26: #{tpu_custom_call.1} parent=1 // pred_check
      _
    $region27: #{tpu_custom_call.1} parent=1 // pred_check_branch
      %1145 = sbr.rel (0) target = $region29
    $region28: #{tpu_custom_call.1} parent=1 // pred_region
      %1146 = dma.done [#allocation3], 12288
    $region29: #{tpu_custom_call.1} parent=1 // pred_fallthru
      _
    %1147 = vsyncpa [#allocation3], 1

</llo_original>
